<compile_context>
chip_gen: v5e
topology: v5e:2x2
jax: 0.10.0
libtpu: 0.0.40
codegen_flags: <defaults>
</compile_context>

<pallas_src>
import functools

import jax
import jax.numpy as jnp
from jax.experimental import pallas as pl
from jax.experimental.pallas import tpu as pltpu

LN_EPS = 1e-5   # PyTorch nn.LayerNorm default
SUBLANE = 8


def _round_up(x, m):
    return ((x + m - 1) // m) * m


def _layernorm(h, gamma, beta):
    # PyTorch LayerNorm: biased variance over last dim, eps inside sqrt, affine.
    mean = jnp.mean(h, axis=-1, keepdims=True)
    cent = h - mean
    var = jnp.mean(cent * cent, axis=-1, keepdims=True)
    return cent * jax.lax.rsqrt(var + LN_EPS) * gamma + beta


def actor_kernel(x_ref, w1_ref, p1_ref, w2_ref, p2_ref, w3_ref, b3_ref, out_ref):
    # x_ref:  (TB, D) f32 batch tile
    # p1_ref/p2_ref: (3, H) slabs holding rows [bias, ln_gamma, ln_beta]
    # w3_ref: (hl_two, n_actions), b3_ref: (1, n_actions) — unpadded head
    x = x_ref[...]
    p1 = p1_ref[...]
    p2 = p2_ref[...]

    # Layer 1: Linear -> LayerNorm -> ReLU
    h1 = jnp.dot(x, w1_ref[...], preferred_element_type=jnp.float32) + p1[0:1, :]
    h1 = jnp.maximum(_layernorm(h1, p1[1:2, :], p1[2:3, :]), 0.0)

    # Layer 2: Linear -> LayerNorm -> ReLU
    h2 = jnp.dot(h1, w2_ref[...], preferred_element_type=jnp.float32) + p2[0:1, :]
    h2 = jnp.maximum(_layernorm(h2, p2[1:2, :], p2[2:3, :]), 0.0)

    # Output head: Linear -> tanh, stored at native width (no lane padding).
    a = jnp.dot(h2, w3_ref[...], preferred_element_type=jnp.float32) + b3_ref[...]
    out_ref[...] = jnp.tanh(a)


def prepare_params(params):
    """One-time packing of per-layer (bias, gamma, beta) into single slabs.

    Do this once after init / checkpoint load; the jitted forward then does no
    per-call parameter reshuffling."""
    return {
        "w1": params["w1"],
        "p1": jnp.concatenate([params["b1"], params["g1"], params["be1"]], axis=0),
        "w2": params["w2"],
        "p2": jnp.concatenate([params["b2"], params["g2"], params["be2"]], axis=0),
        "w3": params["w3"],
        "b3": params["b3"],
    }


@functools.partial(jax.jit, static_argnames=("tb",))
def actor_forward(state, packed, tb=4096):
    """state: (B, input_dim) f32. packed: dict from prepare_params.
    Returns (B, n_actions) f32."""
    B, D = state.shape
    hl_one = packed["w1"].shape[1]
    hl_two = packed["w2"].shape[1]
    n_actions = packed["w3"].shape[1]

    # Batch tile: multiple of 8 sublanes, capped at `tb`. For non-tiny batches
    # aim for >= 2 grid steps so the "parallel" batch axis can be sharded over
    # v7x's two TensorCores (near-noop on v5e/v6e; costs one ~0.35us step).
    target_steps = 2 if B >= 64 else 1
    TB = min(_round_up(pl.cdiv(B, target_steps), SUBLANE), tb)
    TB = max(TB, SUBLANE)
    grid = (pl.cdiv(B, TB),)

    const = lambda i: (0, 0)   # weights / params: same block every grid step (DMA once)

    out = pl.pallas_call(
        actor_kernel,
        out_shape=jax.ShapeDtypeStruct((B, n_actions), jnp.float32),
        grid=grid,
        in_specs=[
            pl.BlockSpec((TB, D), lambda i: (i, 0)),       # state tile (ragged last block masked)
            pl.BlockSpec((D, hl_one), const),              # w1
            pl.BlockSpec((3, hl_one), const),              # [b1; g1; be1]
            pl.BlockSpec((hl_one, hl_two), const),         # w2
            pl.BlockSpec((3, hl_two), const),              # [b2; g2; be2]
            pl.BlockSpec((hl_two, n_actions), const),      # w3 (unpadded)
            pl.BlockSpec((1, n_actions), const),           # b3 (unpadded)
        ],
        out_specs=pl.BlockSpec((TB, n_actions), lambda i: (i, 0)),
        compiler_params=pltpu.CompilerParams(
            dimension_semantics=("parallel",),             # v7x: shard batch over 2 TCs
        ),
    )(state, packed["w1"], packed["p1"], packed["w2"], packed["p2"],
      packed["w3"], packed["b3"])

    return out


def init_actor_params(key, input_dim, hl_one, hl_two, n_actions):
    """Deterministic init mirroring the PyTorch module's __init__.

    Note: the original code uses layer.weight.size()[0] == out_features for the
    uniform bound (1/sqrt(out_features)); replicated faithfully.
    """
    k1, k2, k3, k4, k5, k6 = jax.random.split(key, 6)

    f1 = 1.0 / jnp.sqrt(jnp.float32(hl_one))   # bound for `input` layer
    f2 = 1.0 / jnp.sqrt(jnp.float32(hl_two))   # bound for `hidden` layer
    f3 = 0.003                                 # bound for `mu` layer

    params = {
        # Linear layers, stored (in, out) so kernel does x @ W + b.
        "w1": jax.random.uniform(k1, (input_dim, hl_one), jnp.float32, -f1, f1),
        "b1": jax.random.uniform(k2, (1, hl_one), jnp.float32, -f1, f1),
        "w2": jax.random.uniform(k3, (hl_one, hl_two), jnp.float32, -f2, f2),
        "b2": jax.random.uniform(k4, (1, hl_two), jnp.float32, -f2, f2),
        "w3": jax.random.uniform(k5, (hl_two, n_actions), jnp.float32, -f3, f3),
        "b3": jax.random.uniform(k6, (1, n_actions), jnp.float32, -f3, f3),
        # LayerNorm affine params (PyTorch default init: weight=1, bias=0)
        "g1": jnp.ones((1, hl_one), jnp.float32),
        "be1": jnp.zeros((1, hl_one), jnp.float32),
        "g2": jnp.ones((1, hl_two), jnp.float32),
        "be2": jnp.zeros((1, hl_two), jnp.float32),
    }
    return params


def actor_forward_ref(state, params):
    """Pure-JAX reference of the same forward pass (correctness check)."""
    def ln(h, g, b):
        m = jnp.mean(h, axis=-1, keepdims=True)
        v = jnp.mean((h - m) ** 2, axis=-1, keepdims=True)
        return (h - m) / jnp.sqrt(v + LN_EPS) * g + b

    h1 = jax.nn.relu(ln(state @ params["w1"] + params["b1"], params["g1"], params["be1"]))
    h2 = jax.nn.relu(ln(h1 @ params["w2"] + params["b2"], params["g2"], params["be2"]))
    return jnp.tanh(h2 @ params["w3"] + params["b3"])


if __name__ == "__main__":
    # Small DDPG-Lander-like shapes: 8-dim observation, 4 actions, 32-wide hidden layers.
    B, INPUT_DIM, HL_ONE, HL_TWO, N_ACTIONS = 8, 8, 32, 32, 4

    key = jax.random.PRNGKey(0)
    pkey, skey, bkey = jax.random.split(key, 3)

    params = init_actor_params(pkey, INPUT_DIM, HL_ONE, HL_TWO, N_ACTIONS)
    packed = prepare_params(params)   # one-time packing, outside the hot path

    # Small batch (single grid step).
    state = jax.random.normal(skey, (B, INPUT_DIM), dtype=jnp.float32)
    out = jax.block_until_ready(actor_forward(state, packed))
    ref = actor_forward_ref(state, params)
    assert out.shape == (B, N_ACTIONS)
    assert jnp.allclose(out, ref, atol=1e-5, rtol=1e-5), "Pallas kernel mismatch (B=8)"

    # Larger, non-multiple batch exercises the multi-step grid + ragged last block.
    big = jax.random.normal(bkey, (1000, INPUT_DIM), dtype=jnp.float32)
    out_big = jax.block_until_ready(actor_forward(big, packed))
    ref_big = actor_forward_ref(big, params)
    assert out_big.shape == (1000, N_ACTIONS)
    assert jnp.allclose(out_big, ref_big, atol=1e-5, rtol=1e-5), "Pallas kernel mismatch (B=1000)"

    print("KERNEL_OK")
</pallas_src>

<mosaic_0001>
module attributes {stable_mosaic.version = 11 : i64} {
  func.func @actor_kernel(%arg0: i32, %arg1: memref<8x8xf32, #tpu.memory_space<vmem>>, %arg2: memref<8x32xf32, #tpu.memory_space<vmem>>, %arg3: memref<3x32xf32, #tpu.memory_space<vmem>>, %arg4: memref<32x32xf32, #tpu.memory_space<vmem>>, %arg5: memref<3x32xf32, #tpu.memory_space<vmem>>, %arg6: memref<32x4xf32, #tpu.memory_space<vmem>>, %arg7: memref<1x4xf32, #tpu.memory_space<vmem>>, %arg8: memref<8x4xf32, #tpu.memory_space<vmem>>) attributes {dimension_semantics = [#tpu.dimension_semantics<parallel>], iteration_bounds = array<i64: 1>, scalar_prefetch = 0 : i64, scratch_operands = 0 : i64, tpu.core_type = #tpu.core_type<tc>, window_params = [{transform_indices = @transform_0, window_bounds = array<i64: 8, 8>}, {pipeline_mode = #tpu.pipeline_mode<synchronous>, transform_indices = @transform_1, window_bounds = array<i64: 8, 32>}, {pipeline_mode = #tpu.pipeline_mode<synchronous>, transform_indices = @transform_2, window_bounds = array<i64: 3, 32>}, {pipeline_mode = #tpu.pipeline_mode<synchronous>, transform_indices = @transform_3, window_bounds = array<i64: 32, 32>}, {pipeline_mode = #tpu.pipeline_mode<synchronous>, transform_indices = @transform_4, window_bounds = array<i64: 3, 32>}, {pipeline_mode = #tpu.pipeline_mode<synchronous>, transform_indices = @transform_5, window_bounds = array<i64: 32, 4>}, {pipeline_mode = #tpu.pipeline_mode<synchronous>, transform_indices = @transform_6, window_bounds = array<i64: 1, 4>}, {transform_indices = @transform_7, window_bounds = array<i64: 8, 4>}]} {
    %c0 = arith.constant 0 : index
    %c0_0 = arith.constant 0 : index
    %0 = vector.load %arg1[%c0, %c0_0] : memref<8x8xf32, #tpu.memory_space<vmem>>, vector<8x8xf32>
    %c0_1 = arith.constant 0 : index
    %c0_2 = arith.constant 0 : index
    %1 = vector.load %arg3[%c0_1, %c0_2] : memref<3x32xf32, #tpu.memory_space<vmem>>, vector<3x32xf32>
    %c0_3 = arith.constant 0 : index
    %c0_4 = arith.constant 0 : index
    %2 = vector.load %arg5[%c0_3, %c0_4] : memref<3x32xf32, #tpu.memory_space<vmem>>, vector<3x32xf32>
    %c0_5 = arith.constant 0 : index
    %c0_6 = arith.constant 0 : index
    %3 = vector.load %arg2[%c0_5, %c0_6] : memref<8x32xf32, #tpu.memory_space<vmem>>, vector<8x32xf32>
    %cst = arith.constant dense<0.000000e+00> : vector<8x32xf32>
    %4 = tpu.matmul %0, %3, %cst {dimension_numbers = #tpu.dot_dimension_numbers<[1], [0], [0], [1], [0, 0, 1, 1], [], []>} : vector<8x8xf32>, vector<8x32xf32>, vector<8x32xf32> -> vector<8x32xf32>
    %5 = vector.extract_strided_slice %1 {offsets = [0, 0], sizes = [1, 32], strides = [1, 1]} : vector<3x32xf32> to vector<1x32xf32>
    %6 = vector.broadcast %5 : vector<1x32xf32> to vector<8x32xf32>
    %7 = arith.addf %4, %6 : vector<8x32xf32>
    %8 = vector.extract_strided_slice %1 {offsets = [1, 0], sizes = [1, 32], strides = [1, 1]} : vector<3x32xf32> to vector<1x32xf32>
    %9 = vector.extract_strided_slice %1 {offsets = [2, 0], sizes = [1, 32], strides = [1, 1]} : vector<3x32xf32> to vector<1x32xf32>
    %cst_7 = arith.constant dense<0.000000e+00> : vector<8xf32>
    %10 = vector.multi_reduction <add>, %7, %cst_7 [1] : vector<8x32xf32> to vector<8xf32>
    %11 = vector.shape_cast %10 : vector<8xf32> to vector<8x1xf32>
    %cst_8 = arith.constant 3.200000e+01 : f32
    %12 = vector.broadcast %cst_8 : f32 to vector<8x1xf32>
    %13 = arith.divf %11, %12 : vector<8x1xf32>
    %14 = vector.broadcast %13 : vector<8x1xf32> to vector<8x32xf32>
    %15 = arith.subf %7, %14 : vector<8x32xf32>
    %16 = arith.mulf %15, %15 : vector<8x32xf32>
    %cst_9 = arith.constant dense<0.000000e+00> : vector<8xf32>
    %17 = vector.multi_reduction <add>, %16, %cst_9 [1] : vector<8x32xf32> to vector<8xf32>
    %18 = vector.shape_cast %17 : vector<8xf32> to vector<8x1xf32>
    %cst_10 = arith.constant 3.200000e+01 : f32
    %19 = vector.broadcast %cst_10 : f32 to vector<8x1xf32>
    %20 = arith.divf %18, %19 : vector<8x1xf32>
    %cst_11 = arith.constant 9.99999974E-6 : f32
    %21 = vector.broadcast %cst_11 : f32 to vector<8x1xf32>
    %22 = arith.addf %20, %21 : vector<8x1xf32>
    %23 = math.rsqrt %22 : vector<8x1xf32>
    %24 = vector.broadcast %23 : vector<8x1xf32> to vector<8x32xf32>
    %25 = arith.mulf %15, %24 : vector<8x32xf32>
    %26 = vector.broadcast %8 : vector<1x32xf32> to vector<8x32xf32>
    %27 = arith.mulf %25, %26 : vector<8x32xf32>
    %28 = vector.broadcast %9 : vector<1x32xf32> to vector<8x32xf32>
    %29 = arith.addf %27, %28 : vector<8x32xf32>
    %cst_12 = arith.constant 0.000000e+00 : f32
    %30 = vector.broadcast %cst_12 : f32 to vector<8x32xf32>
    %31 = arith.maximumf %29, %30 : vector<8x32xf32>
    %c0_13 = arith.constant 0 : index
    %c0_14 = arith.constant 0 : index
    %32 = vector.load %arg4[%c0_13, %c0_14] : memref<32x32xf32, #tpu.memory_space<vmem>>, vector<32x32xf32>
    %cst_15 = arith.constant dense<0.000000e+00> : vector<8x32xf32>
    %33 = tpu.matmul %31, %32, %cst_15 {dimension_numbers = #tpu.dot_dimension_numbers<[1], [0], [0], [1], [0, 0, 1, 1], [], []>} : vector<8x32xf32>, vector<32x32xf32>, vector<8x32xf32> -> vector<8x32xf32>
    %34 = vector.extract_strided_slice %2 {offsets = [0, 0], sizes = [1, 32], strides = [1, 1]} : vector<3x32xf32> to vector<1x32xf32>
    %35 = vector.broadcast %34 : vector<1x32xf32> to vector<8x32xf32>
    %36 = arith.addf %33, %35 : vector<8x32xf32>
    %37 = vector.extract_strided_slice %2 {offsets = [1, 0], sizes = [1, 32], strides = [1, 1]} : vector<3x32xf32> to vector<1x32xf32>
    %38 = vector.extract_strided_slice %2 {offsets = [2, 0], sizes = [1, 32], strides = [1, 1]} : vector<3x32xf32> to vector<1x32xf32>
    %cst_16 = arith.constant dense<0.000000e+00> : vector<8xf32>
    %39 = vector.multi_reduction <add>, %36, %cst_16 [1] : vector<8x32xf32> to vector<8xf32>
    %40 = vector.shape_cast %39 : vector<8xf32> to vector<8x1xf32>
    %cst_17 = arith.constant 3.200000e+01 : f32
    %41 = vector.broadcast %cst_17 : f32 to vector<8x1xf32>
    %42 = arith.divf %40, %41 : vector<8x1xf32>
    %43 = vector.broadcast %42 : vector<8x1xf32> to vector<8x32xf32>
    %44 = arith.subf %36, %43 : vector<8x32xf32>
    %45 = arith.mulf %44, %44 : vector<8x32xf32>
    %cst_18 = arith.constant dense<0.000000e+00> : vector<8xf32>
    %46 = vector.multi_reduction <add>, %45, %cst_18 [1] : vector<8x32xf32> to vector<8xf32>
    %47 = vector.shape_cast %46 : vector<8xf32> to vector<8x1xf32>
    %cst_19 = arith.constant 3.200000e+01 : f32
    %48 = vector.broadcast %cst_19 : f32 to vector<8x1xf32>
    %49 = arith.divf %47, %48 : vector<8x1xf32>
    %cst_20 = arith.constant 9.99999974E-6 : f32
    %50 = vector.broadcast %cst_20 : f32 to vector<8x1xf32>
    %51 = arith.addf %49, %50 : vector<8x1xf32>
    %52 = math.rsqrt %51 : vector<8x1xf32>
    %53 = vector.broadcast %52 : vector<8x1xf32> to vector<8x32xf32>
    %54 = arith.mulf %44, %53 : vector<8x32xf32>
    %55 = vector.broadcast %37 : vector<1x32xf32> to vector<8x32xf32>
    %56 = arith.mulf %54, %55 : vector<8x32xf32>
    %57 = vector.broadcast %38 : vector<1x32xf32> to vector<8x32xf32>
    %58 = arith.addf %56, %57 : vector<8x32xf32>
    %cst_21 = arith.constant 0.000000e+00 : f32
    %59 = vector.broadcast %cst_21 : f32 to vector<8x32xf32>
    %60 = arith.maximumf %58, %59 : vector<8x32xf32>
    %c0_22 = arith.constant 0 : index
    %c0_23 = arith.constant 0 : index
    %61 = vector.load %arg6[%c0_22, %c0_23] : memref<32x4xf32, #tpu.memory_space<vmem>>, vector<32x4xf32>
    %cst_24 = arith.constant dense<0.000000e+00> : vector<8x4xf32>
    %62 = tpu.matmul %60, %61, %cst_24 {dimension_numbers = #tpu.dot_dimension_numbers<[1], [0], [0], [1], [0, 0, 1, 1], [], []>} : vector<8x32xf32>, vector<32x4xf32>, vector<8x4xf32> -> vector<8x4xf32>
    %c0_25 = arith.constant 0 : index
    %c0_26 = arith.constant 0 : index
    %63 = vector.load %arg7[%c0_25, %c0_26] : memref<1x4xf32, #tpu.memory_space<vmem>>, vector<1x4xf32>
    %64 = vector.broadcast %63 : vector<1x4xf32> to vector<8x4xf32>
    %65 = arith.addf %62, %64 : vector<8x4xf32>
    %66 = math.tanh %65 : vector<8x4xf32>
    %c0_27 = arith.constant 0 : index
    %c0_28 = arith.constant 0 : index
    %67 = vector.load %arg8[%c0_27, %c0_28] : memref<8x4xf32, #tpu.memory_space<vmem>>, vector<8x4xf32>
    tpu.vector_store %arg8[%c0_27, %c0_28], %66 {strides = array<i32>} : memref<8x4xf32, #tpu.memory_space<vmem>>, vector<8x4xf32>,
    return
  }
  func.func @transform_0(%arg0: i32) -> (i32, i32) {
    %c0_i32 = arith.constant 0 : i32
    %c0_i32_0 = arith.constant 0 : i32
    return %arg0, %c0_i32 : i32, i32
  }
  func.func @transform_1(%arg0: i32) -> (i32, i32) {
    %c0_i32 = arith.constant 0 : i32
    %c0_i32_0 = arith.constant 0 : i32
    %c0_i32_1 = arith.constant 0 : i32
    return %c0_i32, %c0_i32_0 : i32, i32
  }
  func.func @transform_2(%arg0: i32) -> (i32, i32) {
    %c0_i32 = arith.constant 0 : i32
    %c0_i32_0 = arith.constant 0 : i32
    %c0_i32_1 = arith.constant 0 : i32
    return %c0_i32, %c0_i32_0 : i32, i32
  }
  func.func @transform_3(%arg0: i32) -> (i32, i32) {
    %c0_i32 = arith.constant 0 : i32
    %c0_i32_0 = arith.constant 0 : i32
    %c0_i32_1 = arith.constant 0 : i32
    return %c0_i32, %c0_i32_0 : i32, i32
  }
  func.func @transform_4(%arg0: i32) -> (i32, i32) {
    %c0_i32 = arith.constant 0 : i32
    %c0_i32_0 = arith.constant 0 : i32
    %c0_i32_1 = arith.constant 0 : i32
    return %c0_i32, %c0_i32_0 : i32, i32
  }
  func.func @transform_5(%arg0: i32) -> (i32, i32) {
    %c0_i32 = arith.constant 0 : i32
    %c0_i32_0 = arith.constant 0 : i32
    %c0_i32_1 = arith.constant 0 : i32
    return %c0_i32, %c0_i32_0 : i32, i32
  }
  func.func @transform_6(%arg0: i32) -> (i32, i32) {
    %c0_i32 = arith.constant 0 : i32
    %c0_i32_0 = arith.constant 0 : i32
    %c0_i32_1 = arith.constant 0 : i32
    return %c0_i32, %c0_i32_0 : i32, i32
  }
  func.func @transform_7(%arg0: i32) -> (i32, i32) {
    %c0_i32 = arith.constant 0 : i32
    %c0_i32_0 = arith.constant 0 : i32
    return %arg0, %c0_i32 : i32, i32
  }
}

</mosaic_0001>

<llo_original>
// kernel: actor_forward.1
$region0: #{actor_forward.1}
  #allocation0 [shape = 'u32[]', space=smem, size = 0x4, offset = 0x4, fixed_abs, tag = 'smem constant byte address 0x4 - core index']
  #allocation1 [shape = 'u32[72,128]{1,0:T(1,128)}', space=vmem, size = 0x9000, scoped, tag = 'internal scratch']
  %s0 = inlined_call_operand.hbm [shape: f32[8,8], index: 0, kind: input, shape index: {}]
  %s1 = inlined_call_operand.hbm [shape: f32[8,32], index: 1, kind: input, shape index: {}]
  %s2 = inlined_call_operand.vmem [shape: f32[3,32], index: 2, kind: input, shape index: {}]
  %s3 = inlined_call_operand.vmem [shape: f32[32,32], index: 3, kind: input, shape index: {}]
  %s4 = inlined_call_operand.hbm [shape: f32[3,32], index: 4, kind: input, shape index: {}]
  %s5 = inlined_call_operand.vmem [shape: f32[32,4], index: 5, kind: input, shape index: {}]
  %s6 = inlined_call_operand.vmem [shape: f32[1,4], index: 6, kind: input, shape index: {}]
  %s7 = inlined_call_operand.vmem [shape: f32[8,4], index: 7, kind: output, shape index: {}]
  %s8 = sld [smem:[#allocation0]]
  $region50: #{actor_forward.1} parent=0
    _
  %s10 = ssub.s32 1, %s8
  %s11 = scalar_select 0, %s10, %s8
  $region1: #{actor_forward.1} parent=0
    #allocation2 [shape = 'u8[4096]{0}', space=vmem, size = 0x1000, scoped, tag = 'input window, operand 0, single buffered']
    #allocation3 [shape = 's32[1]{0}', space=sflag, size = 0x4, scoped, tag = 'scoped memory for actor_forward.1']
    #allocation4 [shape = 'u8[4096]{0}', space=vmem, size = 0x1000, scoped, tag = 'input window, operand 1, single buffered']
    #allocation5 [shape = 's32[1]{0}', space=sflag, size = 0x4, scoped, tag = 'scoped memory for actor_forward.1']
    #allocation6 [shape = 'u8[2048]{0}', space=vmem, size = 0x800, scoped, tag = 'input window, operand 4, single buffered']
    %12 = vsyncpa [#allocation3], 0
    %13 = vsyncpa [#allocation5], 0
    // Predicated region
    $region2: #{actor_forward.1} parent=1 // pred_check
      _
    $region3: #{actor_forward.1} parent=1 // pred_check_branch
      %15 = sbr.rel (0) target = $region5
    $region4: #{actor_forward.1} parent=1 // pred_region
      %17 = vsyncadd [#allocation3], 0
      %s19 = sshll.u32 %s0, 4
      %s20 = int_to_ptr.hbm [resolvable:$true] %s19
      %s21 = sshll.u32 [#allocation2], 4
      %s22 = int_to_ptr.vmem [resolvable:$true] %s21
      %24 = dma.hbm_to_vmem [thread:$0]  %s20, 128, %s22, [#allocation3]
    $region5: #{actor_forward.1} parent=1 // pred_fallthru
      _
    // Predicated region
    $region6: #{actor_forward.1} parent=1 // pred_check
      _
    $region7: #{actor_forward.1} parent=1 // pred_check_branch
      %26 = sbr.rel (0) target = $region9
    $region8: #{actor_forward.1} parent=1 // pred_region
      %28 = vsyncadd [#allocation5], 0
      %s30 = sshll.u32 %s1, 4
      %s31 = int_to_ptr.hbm [resolvable:$true] %s30
      %s32 = sshll.u32 [#allocation4], 4
      %s33 = int_to_ptr.vmem [resolvable:$true] %s32
      %35 = dma.hbm_to_vmem [thread:$0]  %s31, 128, %s33, [#allocation5]
    $region9: #{actor_forward.1} parent=1 // pred_fallthru
      _
    // Predicated region
    $region10: #{actor_forward.1} parent=1 // pred_check
      _
    $region11: #{actor_forward.1} parent=1 // pred_check_branch
      %37 = sbr.rel (0) target = $region13
    $region12: #{actor_forward.1} parent=1 // pred_region
      _
    $region13: #{actor_forward.1} parent=1 // pred_fallthru
      _
    // Predicated region
    $region14: #{actor_forward.1} parent=1 // pred_check
      _
    $region15: #{actor_forward.1} parent=1 // pred_check_branch
      %39 = sbr.rel (0) target = $region17
    $region16: #{actor_forward.1} parent=1 // pred_region
      _
    $region17: #{actor_forward.1} parent=1 // pred_fallthru
      _
    // Predicated region
    $region18: #{actor_forward.1} parent=1 // pred_check
      _
    $region19: #{actor_forward.1} parent=1 // pred_check_branch
      %41 = sbr.rel (0) target = $region21
    $region20: #{actor_forward.1} parent=1 // pred_region
      %43 = vsyncadd [#allocation5], 0
      %s45 = sshll.u32 %s4, 4
      %s46 = int_to_ptr.hbm [resolvable:$true] %s45
      %s47 = sshll.u32 [#allocation6], 4
      %s48 = int_to_ptr.vmem [resolvable:$true] %s47
      %50 = dma.hbm_to_vmem [thread:$0]  %s46, 64, %s48, [#allocation5]
    $region21: #{actor_forward.1} parent=1 // pred_fallthru
      _
    // Predicated region
    $region22: #{actor_forward.1} parent=1 // pred_check
      _
    $region23: #{actor_forward.1} parent=1 // pred_check_branch
      %52 = sbr.rel (0) target = $region25
    $region24: #{actor_forward.1} parent=1 // pred_region
      _
    $region25: #{actor_forward.1} parent=1 // pred_fallthru
      _
    // Predicated region
    $region26: #{actor_forward.1} parent=1 // pred_check
      _
    $region27: #{actor_forward.1} parent=1 // pred_check_branch
      %54 = sbr.rel (0) target = $region29
    $region28: #{actor_forward.1} parent=1 // pred_region
      _
    $region29: #{actor_forward.1} parent=1 // pred_fallthru
      _
    // Predicated region
    $region30: #{actor_forward.1} parent=1 // pred_check
      _
    $region31: #{actor_forward.1} parent=1 // pred_check_branch
      %56 = sbr.rel (0) target = $region33
    $region32: #{actor_forward.1} parent=1 // pred_region
      %58 = dma.done [#allocation3], 128
    $region33: #{actor_forward.1} parent=1 // pred_fallthru
      _
    // Predicated region
    $region34: #{actor_forward.1} parent=1 // pred_check
      _
    $region35: #{actor_forward.1} parent=1 // pred_check_branch
      %60 = sbr.rel (0) target = $region37
    $region36: #{actor_forward.1} parent=1 // pred_region
      %62 = dma.done [#allocation5], 128
    $region37: #{actor_forward.1} parent=1 // pred_fallthru
      _
    // Predicated region
    $region38: #{actor_forward.1} parent=1 // pred_check
      _
    $region39: #{actor_forward.1} parent=1 // pred_check_branch
      %64 = sbr.rel (0) target = $region41
    $region40: #{actor_forward.1} parent=1 // pred_region
      %66 = dma.done [#allocation5], 64
    $region41: #{actor_forward.1} parent=1 // pred_fallthru
      _
    %v67 = vld [vmem:[#allocation2] sm:$0xff]
    %v68 = vld [vmem:[%s2] sm:$0x7]
    %v69 = vld [vmem:[#allocation6] sm:$0x7]
    %v70 = vld [vmem:[#allocation4] sm:$0xff]
    %v71 = vperm.slane %v68, 0
    %vm72 = vcmask 64512
    %v74 = vsel %vm72, %v67, 0
    %76 = vmatpush.msra.mxu0 0.0
    %77 = vmatpush.msra.mxu0 0.0
    %78 = vmatpush.msra.mxu0 0.0
    %79 = vmatpush.msra.mxu0 0.0
    %80 = vmatpush.msra.mxu0 0.0
    %81 = vmatpush.msra.mxu0 0.0
    %82 = vmatpush.msra.mxu0 0.0
    %83 = vmatpush.msra.mxu0 0.0
    %84 = vmatpush.msra.mxu0 0.0
    %85 = vmatpush.msra.mxu0 0.0
    %86 = vmatpush.msra.mxu0 0.0
    %87 = vmatpush.msra.mxu0 0.0
    %88 = vmatpush.msra.mxu0 0.0
    %89 = vmatpush.msra.mxu0 0.0
    %90 = vmatpush.msra.mxu0 0.0
    %91 = vmatpush.msra.mxu0 %v70
    %92 = vmatmul.f32.gmra.mxu0 %v74
    %v93 = vpop.f32.mrf.mxu0
    %v94 = vadd.f32 %v71, %v93
    %95 = vdwg.mxu0
    %vm96 = vcmask 261120
    %v97 = vsel %vm96, %v94, 0.0
    %98 = vadd.xlane.f32.xlu0 %v97
    %v99 = vpop.xlane.xlu0 %98
    %v100 = vrcp.pop 32.0
    %v101 = vmul.f32 32.0, %v100
    %v102 = vsub.f32 1.0, %v101
    %v103 = vmul.f32 %v100, %v102
    %v104 = vadd.f32 %v100, %v103
    %vm105 = vweird.f32 %v100
    %v106 = vsel %vm105, %v100, %v104
    %v107 = vmul.f32 %v99, %v106
    %v108 = vsub.f32 %v94, %v107
    %v109 = vmul.f32 %v108, %v108
    %v110 = vsel %vm96, %v109, 0.0
    %111 = vadd.xlane.f32.xlu0 %v110
    %v112 = vpop.xlane.xlu0 %111
    %v113 = vmul.f32 %v112, %v106
    %v114 = vadd.f32 %v113, 1e-05
    %v115 = vrsqrt.pop %v114
    %v116 = vmul.f32 %v115, %v114
    %v117 = vmul.f32 %v116, %v115
    %v118 = vmul.f32 0.5, %v117
    %v119 = vsub.f32 1.5, %v118
    %v120 = vmul.f32 %v115, %v119
    %vm121 = vweird.f32 %v114
    %vm122 = vweird.f32 %v115
    %vm123 = vmor %vm121, %vm122
    %v124 = vsel %vm123, %v115, %v120
    %v125 = vmul.f32 %v108, %v124
    %v126 = vperm.slane %v68, 1
    %v127 = vmul.f32 %v125, %v126
    %v128 = vperm.slane %v68, 2
    %v129 = vadd.f32 %v127, %v128
    %v130 = vmax.f32 %v129, 0.0
    %v131 = vld [vmem:[%s3] sm:$0xff]
    %v132 = vld [vmem:[%s3 + $0x8] sm:$0xff]
    %v133 = vld [vmem:[%s3 + $0x10] sm:$0xff]
    %v134 = vld [vmem:[%s3 + $0x18] sm:$0xff]
    %v135 = vperm.slane %v69, 0
    %v137 = vsel %vm96, %v130, 0
    %139 = vmatpush.msra.mxu0 0.0
    %140 = vmatpush.msra.mxu0 0.0
    %141 = vmatpush.msra.mxu0 0.0
    %142 = vmatpush.msra.mxu0 0.0
    %143 = vmatpush.msra.mxu0 0.0
    %144 = vmatpush.msra.mxu0 0.0
    %145 = vmatpush.msra.mxu0 0.0
    %146 = vmatpush.msra.mxu0 0.0
    %147 = vmatpush.msra.mxu0 0.0
    %148 = vmatpush.msra.mxu0 0.0
    %149 = vmatpush.msra.mxu0 0.0
    %150 = vmatpush.msra.mxu0 0.0
    %151 = vmatpush.msra.mxu0 %v134
    %152 = vmatpush.msra.mxu0 %v133
    %153 = vmatpush.msra.mxu0 %v132
    %154 = vmatpush.msra.mxu0 %v131
    %155 = vmatmul.f32.gmra.mxu0 %v137
    %v156 = vpop.f32.mrf.mxu0
    %v157 = vadd.f32 %v135, %v156
    %158 = vdwg.mxu0
    %v159 = vsel %vm96, %v157, 0.0
    %160 = vadd.xlane.f32.xlu0 %v159
    %v161 = vpop.xlane.xlu0 %160
    %v162 = vmul.f32 %v161, %v106
    %v163 = vsub.f32 %v157, %v162
    %v164 = vmul.f32 %v163, %v163
    %v165 = vsel %vm96, %v164, 0.0
    %166 = vadd.xlane.f32.xlu0 %v165
    %v167 = vpop.xlane.xlu0 %166
    %v168 = vmul.f32 %v167, %v106
    %v169 = vadd.f32 %v168, 1e-05
    %v170 = vrsqrt.pop %v169
    %v171 = vmul.f32 %v170, %v169
    %v172 = vmul.f32 %v171, %v170
    %v173 = vmul.f32 0.5, %v172
    %v174 = vsub.f32 1.5, %v173
    %v175 = vmul.f32 %v170, %v174
    %vm176 = vweird.f32 %v169
    %vm177 = vweird.f32 %v170
    %vm178 = vmor %vm176, %vm177
    %v179 = vsel %vm178, %v170, %v175
    %v180 = vmul.f32 %v163, %v179
    %v181 = vperm.slane %v69, 1
    %v182 = vmul.f32 %v180, %v181
    %v183 = vperm.slane %v69, 2
    %v184 = vadd.f32 %v182, %v183
    %v185 = vmax.f32 %v184, 0.0
    %v186 = vld [vmem:[%s5] sm:$0xff]
    %v187 = vld [vmem:[%s5 + $0x8] sm:$0xff]
    %v188 = vld [vmem:[%s5 + $0x10] sm:$0xff]
    %v189 = vld [vmem:[%s5 + $0x18] sm:$0xff]
    %v190 = vld [vmem:[%s6] sm:$0x1]
    %v192 = vperm.slane %v190, 0
    %v195 = vsel %vm96, %v185, 0
    %197 = vmatpush.msra.mxu0 0.0
    %198 = vmatpush.msra.mxu0 0.0
    %199 = vmatpush.msra.mxu0 0.0
    %200 = vmatpush.msra.mxu0 0.0
    %201 = vmatpush.msra.mxu0 0.0
    %202 = vmatpush.msra.mxu0 0.0
    %203 = vmatpush.msra.mxu0 0.0
    %204 = vmatpush.msra.mxu0 0.0
    %205 = vmatpush.msra.mxu0 0.0
    %206 = vmatpush.msra.mxu0 0.0
    %207 = vmatpush.msra.mxu0 0.0
    %208 = vmatpush.msra.mxu0 0.0
    %209 = vmatpush.msra.mxu0 %v189
    %210 = vmatpush.msra.mxu0 %v188
    %211 = vmatpush.msra.mxu0 %v187
    %212 = vmatpush.msra.mxu0 %v186
    %213 = vmatmul.f32.gmra.mxu0 %v195
    %v214 = vpop.f32.mrf.mxu0
    %v215 = vadd.f32 %v192, %v214
    %216 = vdwg.mxu0
    %v217 = vtanh.pop %v215
    %vm218 = vcmask 31744
    %219 = vst.msk [vmem:[%s7] sm:$0xff] %vm218, %v217
    // Predicated region
    $region42: #{actor_forward.1} parent=1 // pred_check
      _
    $region43: #{actor_forward.1} parent=1 // pred_check_branch
      %221 = sbr.rel (0) target = $region45
    $region44: #{actor_forward.1} parent=1 // pred_region
      _
    $region45: #{actor_forward.1} parent=1 // pred_fallthru
      _
    // Predicated region
    $region46: #{actor_forward.1} parent=1 // pred_check
      _
    $region47: #{actor_forward.1} parent=1 // pred_check_branch
      %223 = sbr.rel (0) target = $region49
    $region48: #{actor_forward.1} parent=1 // pred_region
      _
    $region49: #{actor_forward.1} parent=1 // pred_fallthru
      _
    %224 = vsyncpa [#allocation3], 1
    %225 = vsyncpa [#allocation5], 1

</llo_original>
